<compile_context>
chip_gen: v5e
topology: v5e:2x2
jax: 0.10.0
libtpu: 0.0.40
codegen_flags: <defaults>
</compile_context>

<pallas_src>
import jax
import jax.numpy as jnp
from jax.experimental import pallas as pl
from jax.experimental.pallas import tpu as pltpu

LANE = 128              # output last dim padded to a multiple of the lane width
TILE_T_DEFAULT = 1024   # token-dim tile (primary tuning knob); auto-clamped by VMEM


def _round_up(n, m):
    return ((n + m - 1) // m) * m


def _cdiv(a, b):
    return -(-a // b)


def _vmem_limit_bytes():
    """Generation-aware scoped-VMEM limit: 3/4 of physical, capped at 100 MiB.
    -> ~96 MiB on v5e/v6e (128 MiB), ~48 MiB on v7x (64 MiB)."""
    try:
        cap = int(pltpu.get_tpu_info().vmem_capacity_bytes)
    except Exception:
        cap = 64 * 1024 * 1024          # conservative fallback (v7x-sized)
    return min(cap * 3 // 4, 100 * 1024 * 1024)


def _auto_blocking(B, T, C, cout_pad, x_dtype, w_dtype, vmem_limit, tile_t):
    """Pick (block_b, tile_t) so one grid step's VMEM footprint fits the limit."""
    xb = jnp.dtype(x_dtype).itemsize
    wb = jnp.dtype(w_dtype).itemsize
    cb = wb                                   # compute dtype == MXU/weight dtype
    # Resident bytes per activation row: 2x double-buffered x tile, f32 xf + xc
    # temporaries, compute-dtype xn/y, 2x double-buffered out tile + f32 acc.
    row_bytes = C * (2 * xb + 8 + 2 * cb) + cout_pad * (2 * xb + 4)
    weight_bytes = 2 * (C * cout_pad * wb + cout_pad * 4)
    avail = max(vmem_limit - weight_bytes, 8 * row_bytes)
    max_rows = max(8, (avail // row_bytes) // 8 * 8)

    if tile_t is None:
        tile_t = TILE_T_DEFAULT
    tile_t = min(int(tile_t), _round_up(T, 8), int(max_rows))
    tile_t = max(8, (tile_t // 8) * 8)

    # Degenerate grid (whole T in one tile): block several batch elements per
    # step so each DMA stays large and step overhead is amortized.
    if _cdiv(T, tile_t) == 1 and B > 1:
        block_b = int(max(1, min(B, max_rows // tile_t)))
    else:
        block_b = 1
    return block_b, tile_t


def final_layer_kernel(x_ref, shift_ref, scale1_ref, wl_ref, bl_ref, o_ref):
    """One (batch-block, token-tile) step.

    x_ref     : (Bb, Tt, C)        native dtype (f32 / bf16)
    shift_ref : (Bb, 1, C)  f32    precomputed adaLN shift
    scale1_ref: (Bb, 1, C)  f32    precomputed 1 + adaLN scale
    wl_ref    : (C, Cout_pad)      weight dtype, lane-padded
    bl_ref    : (1, Cout_pad) f32
    o_ref     : (Bb, Tt, Cout_pad)
    """
    bb, tt, C = x_ref.shape
    cout_pad = o_ref.shape[-1]
    cdt = wl_ref.dtype                         # MXU / elementwise value dtype

    # ---- LayerNorm statistics in f32 (eps=1e-6, biased variance, no affine) ----
    xf = x_ref[...].astype(jnp.float32)        # (Bb, Tt, C)
    mean = jnp.mean(xf, axis=-1, keepdims=True)
    xc = xf - mean
    var = jnp.mean(xc * xc, axis=-1, keepdims=True)
    inv = jax.lax.rsqrt(var + 1e-6)            # (Bb, Tt, 1) f32

    # ---- normalize + modulate in the MXU dtype (bf16 halves VPU work on v6e/v7x) ----
    xn = xc.astype(cdt) * inv.astype(cdt)                       # (Bb, Tt, C)
    y = xn * scale1_ref[...].astype(cdt) + shift_ref[...].astype(cdt)

    # ---- final linear on the MXU; f32 accumulate, lane-dense store ----
    out = jnp.dot(y.reshape(bb * tt, C), wl_ref[...],
                  preferred_element_type=jnp.float32) + bl_ref[...]
    o_ref[...] = out.reshape(bb, tt, cout_pad).astype(o_ref.dtype)


def prepare_final_layer_params(w_lin, b_lin, dtype=None):
    """Transpose / lane-pad the final-linear params ONCE (parameter-load time).

    w_lin: torch layout (Cout, C); b_lin: (Cout,).
    Returns (Wl^T padded to (C, Cout_pad), bias (1, Cout_pad) f32, Cout)."""
    out_channels, _C = w_lin.shape
    cout_pad = _round_up(max(out_channels, 1), LANE)
    wl_t = jnp.swapaxes(w_lin, 0, 1)                        # (C, Cout)
    if dtype is not None:
        wl_t = wl_t.astype(dtype)
    wl_t = jnp.pad(wl_t, ((0, 0), (0, cout_pad - out_channels)))
    bl = jnp.pad(jnp.asarray(b_lin, jnp.float32),
                 (0, cout_pad - out_channels)).reshape(1, cout_pad)
    return wl_t, bl, out_channels


def final_layer(x, c, w_ada, b_ada, prepared, *, tile_t=None, crop_output=True):
    """x: (B, T, C), c: (B, 1, C). w_ada: (2C, C), b_ada: (2C,) (torch layout).
    `prepared` = prepare_final_layer_params(w_lin, b_lin).
    If crop_output=False the lane-padded (B, T, Cout_pad) slab is returned so a
    downstream consumer can fuse the channel crop and skip one HBM pass."""
    wl_t, bl, out_channels = prepared
    B, T, C = x.shape
    cout_pad = wl_t.shape[1]

    # adaLN branch: a tiny (1,C)@(C,2C) matvec — <1% MXU utilization in-kernel
    # and it would pin the largest weight in VMEM; compute it in plain JAX.
    # Fold the `1 + scale` add here so the kernel applies scale1 directly.
    ada = (jax.nn.silu(c.astype(jnp.float32))
           @ jnp.swapaxes(w_ada, 0, 1).astype(jnp.float32)
           + b_ada.astype(jnp.float32))                     # (B, 1, 2C) f32
    shift = ada[..., :C]                                    # (B, 1, C)
    scale1 = ada[..., C:] + 1.0                             # (B, 1, C)

    vmem_limit = _vmem_limit_bytes()
    block_b, tile_t = _auto_blocking(B, T, C, cout_pad, x.dtype, wl_t.dtype,
                                     vmem_limit, tile_t)

    # No wrapper-side padding of x: ragged last tiles are masked by Pallas
    # (out-of-range rows go through row-wise LN on junk data and their stores
    # are dropped — no cross-row reduction touches them).
    grid = (_cdiv(B, block_b), _cdiv(T, tile_t))

    out = pl.pallas_call(
        final_layer_kernel,
        out_shape=jax.ShapeDtypeStruct((B, T, cout_pad), x.dtype),
        grid_spec=pltpu.PrefetchScalarGridSpec(
            num_scalar_prefetch=0,
            grid=grid,
            in_specs=[
                pl.BlockSpec((block_b, tile_t, C), lambda b, t: (b, t, 0)),  # x tile
                pl.BlockSpec((block_b, 1, C), lambda b, t: (b, 0, 0)),       # shift
                pl.BlockSpec((block_b, 1, C), lambda b, t: (b, 0, 0)),       # 1+scale
                pl.BlockSpec((C, cout_pad), lambda b, t: (0, 0)),            # Wl^T (constant -> resident)
                pl.BlockSpec((1, cout_pad), lambda b, t: (0, 0)),            # bias
            ],
            out_specs=pl.BlockSpec((block_b, tile_t, cout_pad),
                                   lambda b, t: (b, t, 0)),
        ),
        compiler_params=pltpu.CompilerParams(
            dimension_semantics=("parallel", "parallel"),   # megacore shards (B, T) tiles
            vmem_limit_bytes=vmem_limit,
        ),
    )(x, shift, scale1, wl_t, bl)

    if crop_output:
        return out[..., :out_channels]
    return out


def final_layer_ref(x, c, w_ada, b_ada, w_lin, b_lin):
    """Pure-JAX reference matching the PyTorch module."""
    ada = jax.nn.silu(c) @ w_ada.T + b_ada                  # (B, 1, 2C)
    C = x.shape[-1]
    shift, scale = ada[..., :C], ada[..., C:]
    mean = jnp.mean(x, axis=-1, keepdims=True)
    var = jnp.mean((x - mean) ** 2, axis=-1, keepdims=True)
    xn = (x - mean) / jnp.sqrt(var + 1e-6)
    y = xn * (1 + scale) + shift
    return y @ w_lin.T + b_lin


if __name__ == "__main__":
    B, T, C, Cout = 2, 8, 32, 8   # batch, tokens, model_channels, out_channels

    key = jax.random.PRNGKey(0)
    kx, kc, k1, k2, k3, k4 = jax.random.split(key, 6)

    x = jax.random.normal(kx, (B, T, C), dtype=jnp.float32)
    c = jax.random.normal(kc, (B, 1, C), dtype=jnp.float32)

    # Deterministic synthetic parameters (torch Linear layout: (out, in)).
    w_ada = jax.random.normal(k1, (2 * C, C), dtype=jnp.float32) * (1.0 / jnp.sqrt(C))
    b_ada = jax.random.normal(k2, (2 * C,), dtype=jnp.float32) * 0.1
    w_lin = jax.random.normal(k3, (Cout, C), dtype=jnp.float32) * (1.0 / jnp.sqrt(C))
    b_lin = jax.random.normal(k4, (Cout,), dtype=jnp.float32) * 0.1

    # ---- f32 path ----
    prepared = prepare_final_layer_params(w_lin, b_lin)
    out = jax.block_until_ready(final_layer(x, c, w_ada, b_ada, prepared))
    ref = final_layer_ref(x, c, w_ada, b_ada, w_lin, b_lin)
    assert out.shape == (B, T, Cout)
    assert jnp.allclose(out, ref, atol=1e-4, rtol=1e-4), "f32 mismatch vs reference"

    # ---- bf16 activation/weight path (looser tolerance, matches review note) ----
    x_bf = x.astype(jnp.bfloat16)
    c_bf = c.astype(jnp.bfloat16)
    prepared_bf = prepare_final_layer_params(w_lin, b_lin, dtype=jnp.bfloat16)
    out_bf = jax.block_until_ready(final_layer(x_bf, c_bf, w_ada, b_ada, prepared_bf))
    ref_bf = final_layer_ref(x_bf.astype(jnp.float32), c_bf.astype(jnp.float32),
                             w_ada, b_ada, w_lin, b_lin)
    assert out_bf.shape == (B, T, Cout)
    assert jnp.allclose(out_bf.astype(jnp.float32), ref_bf, atol=5e-2, rtol=5e-2), \
        "bf16 mismatch vs reference"

    print("KERNEL_OK")
</pallas_src>

<mosaic_0001>
module attributes {stable_mosaic.version = 11 : i64} {
  func.func @final_layer_kernel(%arg0: i32, %arg1: i32, %arg2: memref<2x8x32xf32, #tpu.memory_space<vmem>>, %arg3: memref<2x1x32xf32, #tpu.memory_space<vmem>>, %arg4: memref<2x1x32xf32, #tpu.memory_space<vmem>>, %arg5: memref<32x128xf32, #tpu.memory_space<vmem>>, %arg6: memref<1x128xf32, #tpu.memory_space<vmem>>, %arg7: memref<2x8x128xf32, #tpu.memory_space<vmem>>) attributes {dimension_semantics = [#tpu.dimension_semantics<parallel>, #tpu.dimension_semantics<parallel>], iteration_bounds = array<i64: 1, 1>, scalar_prefetch = 0 : i64, scratch_operands = 0 : i64, tpu.core_type = #tpu.core_type<tc>, window_params = [{transform_indices = @transform_0, window_bounds = array<i64: 2, 8, 32>}, {transform_indices = @transform_1, window_bounds = array<i64: 2, 1, 32>}, {transform_indices = @transform_2, window_bounds = array<i64: 2, 1, 32>}, {pipeline_mode = #tpu.pipeline_mode<synchronous>, transform_indices = @transform_3, window_bounds = array<i64: 32, 128>}, {pipeline_mode = #tpu.pipeline_mode<synchronous>, transform_indices = @transform_4, window_bounds = array<i64: 1, 128>}, {transform_indices = @transform_5, window_bounds = array<i64: 2, 8, 128>}]} {
    %c0 = arith.constant 0 : index
    %c0_0 = arith.constant 0 : index
    %c0_1 = arith.constant 0 : index
    %0 = vector.load %arg2[%c0, %c0_0, %c0_1] : memref<2x8x32xf32, #tpu.memory_space<vmem>>, vector<2x8x32xf32>
    %cst = arith.constant dense<0.000000e+00> : vector<2x8xf32>
    %1 = vector.multi_reduction <add>, %0, %cst [2] : vector<2x8x32xf32> to vector<2x8xf32>
    %2 = vector.shape_cast %1 : vector<2x8xf32> to vector<2x8x1xf32>
    %cst_2 = arith.constant 3.200000e+01 : f32
    %3 = vector.broadcast %cst_2 : f32 to vector<2x8x1xf32>
    %4 = arith.divf %2, %3 : vector<2x8x1xf32>
    %5 = vector.broadcast %4 : vector<2x8x1xf32> to vector<2x8x32xf32>
    %6 = arith.subf %0, %5 : vector<2x8x32xf32>
    %7 = arith.mulf %6, %6 : vector<2x8x32xf32>
    %cst_3 = arith.constant dense<0.000000e+00> : vector<2x8xf32>
    %8 = vector.multi_reduction <add>, %7, %cst_3 [2] : vector<2x8x32xf32> to vector<2x8xf32>
    %9 = vector.shape_cast %8 : vector<2x8xf32> to vector<2x8x1xf32>
    %cst_4 = arith.constant 3.200000e+01 : f32
    %10 = vector.broadcast %cst_4 : f32 to vector<2x8x1xf32>
    %11 = arith.divf %9, %10 : vector<2x8x1xf32>
    %cst_5 = arith.constant 9.99999997E-7 : f32
    %12 = vector.broadcast %cst_5 : f32 to vector<2x8x1xf32>
    %13 = arith.addf %11, %12 : vector<2x8x1xf32>
    %14 = math.rsqrt %13 : vector<2x8x1xf32>
    %15 = vector.broadcast %14 : vector<2x8x1xf32> to vector<2x8x32xf32>
    %16 = arith.mulf %6, %15 : vector<2x8x32xf32>
    %c0_6 = arith.constant 0 : index
    %c0_7 = arith.constant 0 : index
    %c0_8 = arith.constant 0 : index
    %17 = vector.load %arg4[%c0_6, %c0_7, %c0_8] : memref<2x1x32xf32, #tpu.memory_space<vmem>>, vector<2x1x32xf32>
    %18 = vector.broadcast %17 : vector<2x1x32xf32> to vector<2x8x32xf32>
    %19 = arith.mulf %16, %18 : vector<2x8x32xf32>
    %c0_9 = arith.constant 0 : index
    %c0_10 = arith.constant 0 : index
    %c0_11 = arith.constant 0 : index
    %20 = vector.load %arg3[%c0_9, %c0_10, %c0_11] : memref<2x1x32xf32, #tpu.memory_space<vmem>>, vector<2x1x32xf32>
    %21 = vector.broadcast %20 : vector<2x1x32xf32> to vector<2x8x32xf32>
    %22 = arith.addf %19, %21 : vector<2x8x32xf32>
    %23 = vector.shape_cast %22 : vector<2x8x32xf32> to vector<16x32xf32>
    %c0_12 = arith.constant 0 : index
    %c0_13 = arith.constant 0 : index
    %24 = vector.load %arg5[%c0_12, %c0_13] : memref<32x128xf32, #tpu.memory_space<vmem>>, vector<32x128xf32>
    %cst_14 = arith.constant dense<0.000000e+00> : vector<16x128xf32>
    %25 = tpu.matmul %23, %24, %cst_14 {dimension_numbers = #tpu.dot_dimension_numbers<[1], [0], [0], [1], [0, 0, 1, 1], [], []>} : vector<16x32xf32>, vector<32x128xf32>, vector<16x128xf32> -> vector<16x128xf32>
    %c0_15 = arith.constant 0 : index
    %c0_16 = arith.constant 0 : index
    %26 = vector.load %arg6[%c0_15, %c0_16] : memref<1x128xf32, #tpu.memory_space<vmem>>, vector<1x128xf32>
    %27 = vector.broadcast %26 : vector<1x128xf32> to vector<16x128xf32>
    %28 = arith.addf %25, %27 : vector<16x128xf32>
    %29 = vector.shape_cast %28 : vector<16x128xf32> to vector<2x8x128xf32>
    %c0_17 = arith.constant 0 : index
    %c0_18 = arith.constant 0 : index
    %c0_19 = arith.constant 0 : index
    %30 = vector.load %arg7[%c0_17, %c0_18, %c0_19] : memref<2x8x128xf32, #tpu.memory_space<vmem>>, vector<2x8x128xf32>
    tpu.vector_store %arg7[%c0_17, %c0_18, %c0_19], %29 {strides = array<i32>} : memref<2x8x128xf32, #tpu.memory_space<vmem>>, vector<2x8x128xf32>,
    return
  }
  func.func @transform_0(%arg0: i32, %arg1: i32) -> (i32, i32, i32) {
    %c0_i32 = arith.constant 0 : i32
    %c0_i32_0 = arith.constant 0 : i32
    return %arg0, %arg1, %c0_i32 : i32, i32, i32
  }
  func.func @transform_1(%arg0: i32, %arg1: i32) -> (i32, i32, i32) {
    %c0_i32 = arith.constant 0 : i32
    %c0_i32_0 = arith.constant 0 : i32
    %c0_i32_1 = arith.constant 0 : i32
    return %arg0, %c0_i32, %c0_i32_0 : i32, i32, i32
  }
  func.func @transform_2(%arg0: i32, %arg1: i32) -> (i32, i32, i32) {
    %c0_i32 = arith.constant 0 : i32
    %c0_i32_0 = arith.constant 0 : i32
    %c0_i32_1 = arith.constant 0 : i32
    return %arg0, %c0_i32, %c0_i32_0 : i32, i32, i32
  }
  func.func @transform_3(%arg0: i32, %arg1: i32) -> (i32, i32) {
    %c0_i32 = arith.constant 0 : i32
    %c0_i32_0 = arith.constant 0 : i32
    %c0_i32_1 = arith.constant 0 : i32
    return %c0_i32, %c0_i32_0 : i32, i32
  }
  func.func @transform_4(%arg0: i32, %arg1: i32) -> (i32, i32) {
    %c0_i32 = arith.constant 0 : i32
    %c0_i32_0 = arith.constant 0 : i32
    %c0_i32_1 = arith.constant 0 : i32
    return %c0_i32, %c0_i32_0 : i32, i32
  }
  func.func @transform_5(%arg0: i32, %arg1: i32) -> (i32, i32, i32) {
    %c0_i32 = arith.constant 0 : i32
    %c0_i32_0 = arith.constant 0 : i32
    return %arg0, %arg1, %c0_i32 : i32, i32, i32
  }
}

</mosaic_0001>

<llo_original>
// kernel: tpu_custom_call.1
$region0: #{tpu_custom_call.1}
  #allocation0 [shape = 'u32[]', space=smem, size = 0x4, offset = 0x4, fixed_abs, tag = 'smem constant byte address 0x4 - core index']
  #allocation1 [shape = 'u32[72,128]{1,0:T(1,128)}', space=vmem, size = 0x9000, scoped, tag = 'internal scratch']
  %s0 = inlined_call_operand.hbm [shape: f32[2,8,32], index: 0, kind: input, shape index: {}]
  %s1 = inlined_call_operand.hbm [shape: f32[2,1,32], index: 1, kind: input, shape index: {}]
  %s2 = inlined_call_operand.hbm [shape: f32[2,1,32], index: 2, kind: input, shape index: {}]
  %s3 = inlined_call_operand.hbm [shape: f32[32,128], index: 3, kind: input, shape index: {}]
  %s4 = inlined_call_operand.vmem [shape: f32[1,128], index: 4, kind: input, shape index: {}]
  %s5 = inlined_call_operand.hbm [shape: f32[2,8,128], index: 5, kind: output, shape index: {}]
  %s6 = sld [smem:[#allocation0]]
  $region46: #{tpu_custom_call.1} parent=0
    _
  %s8 = ssub.s32 1, %s6
  %s9 = scalar_select 0, %s8, %s6
  $region1: #{tpu_custom_call.1} parent=0
    #allocation2 [shape = 'u8[8192]{0}', space=vmem, size = 0x2000, scoped, tag = 'input window, operand 0, single buffered']
    #allocation3 [shape = 's32[1]{0}', space=sflag, size = 0x4, scoped, tag = 'scoped memory for tpu_custom_call.1']
    #allocation4 [shape = 's32[1]{0}', space=sflag, size = 0x4, scoped, tag = 'scoped memory for tpu_custom_call.1']
    #allocation5 [shape = 'u8[1024]{0}', space=vmem, size = 0x400, scoped, tag = 'input window, operand 1, single buffered']
    #allocation6 [shape = 's32[1]{0}', space=sflag, size = 0x4, scoped, tag = 'scoped memory for tpu_custom_call.1']
    #allocation7 [shape = 'u8[1024]{0}', space=vmem, size = 0x400, scoped, tag = 'input window, operand 2, single buffered']
    #allocation8 [shape = 'u8[16384]{0}', space=vmem, size = 0x4000, scoped, tag = 'input window, operand 3, single buffered']
    #allocation9 [shape = 's32[1]{0}', space=sflag, size = 0x4, scoped, tag = 'scoped memory for tpu_custom_call.1']
    #allocation10 [shape = 'u8[8192]{0}', space=vmem, size = 0x2000, scoped, tag = 'output window, operand 0, single buffered']
    %10 = vsyncpa [#allocation3], 0
    %11 = vsyncpa [#allocation6], 0
    %12 = vsyncpa [#allocation9], 0
    %13 = vsyncpa [#allocation4], 0
    // Predicated region
    $region2: #{tpu_custom_call.1} parent=1 // pred_check
      _
    $region3: #{tpu_custom_call.1} parent=1 // pred_check_branch
      %15 = sbr.rel (0) target = $region5
    $region4: #{tpu_custom_call.1} parent=1 // pred_region
      %17 = vsyncadd [#allocation3], 0
      %s18 = sshll.u32 %s0, 4
      %s19 = int_to_ptr.hbm [resolvable:$true] %s18
      %s20 = sshll.u32 [#allocation2], 4
      %s21 = int_to_ptr.vmem [resolvable:$true] %s20
      %26 = dma.hbm_to_vmem [thread:$0]  %s19, 256, %s21, [#allocation3], 128, 128, 8
    $region5: #{tpu_custom_call.1} parent=1 // pred_fallthru
      _
    // Predicated region
    $region6: #{tpu_custom_call.1} parent=1 // pred_check
      _
    $region7: #{tpu_custom_call.1} parent=1 // pred_check_branch
      %28 = sbr.rel (0) target = $region9
    $region8: #{tpu_custom_call.1} parent=1 // pred_region
      %30 = vsyncadd [#allocation6], 0
      %s31 = sshll.u32 %s1, 4
      %s32 = int_to_ptr.hbm [resolvable:$true] %s31
      %s33 = sshll.u32 [#allocation5], 4
      %s34 = int_to_ptr.vmem [resolvable:$true] %s33
      %39 = dma.hbm_to_vmem [thread:$0]  %s32, 32, %s34, [#allocation6], 16, 16, 1
    $region9: #{tpu_custom_call.1} parent=1 // pred_fallthru
      _
    // Predicated region
    $region10: #{tpu_custom_call.1} parent=1 // pred_check
      _
    $region11: #{tpu_custom_call.1} parent=1 // pred_check_branch
      %41 = sbr.rel (0) target = $region13
    $region12: #{tpu_custom_call.1} parent=1 // pred_region
      %43 = vsyncadd [#allocation6], 0
      %s44 = sshll.u32 %s2, 4
      %s45 = int_to_ptr.hbm [resolvable:$true] %s44
      %s46 = sshll.u32 [#allocation7], 4
      %s47 = int_to_ptr.vmem [resolvable:$true] %s46
      %52 = dma.hbm_to_vmem [thread:$0]  %s45, 32, %s47, [#allocation6], 16, 16, 1
    $region13: #{tpu_custom_call.1} parent=1 // pred_fallthru
      _
    // Predicated region
    $region14: #{tpu_custom_call.1} parent=1 // pred_check
      _
    $region15: #{tpu_custom_call.1} parent=1 // pred_check_branch
      %54 = sbr.rel (0) target = $region17
    $region16: #{tpu_custom_call.1} parent=1 // pred_region
      %56 = vsyncadd [#allocation9], 0
      %s57 = sshll.u32 %s3, 4
      %s58 = int_to_ptr.hbm [resolvable:$true] %s57
      %s59 = sshll.u32 [#allocation8], 4
      %s60 = int_to_ptr.vmem [resolvable:$true] %s59
      %65 = dma.hbm_to_vmem [thread:$0]  %s58, 512, %s60, [#allocation9], 128, 128, 8
    $region17: #{tpu_custom_call.1} parent=1 // pred_fallthru
      _
    // Predicated region
    $region18: #{tpu_custom_call.1} parent=1 // pred_check
      _
    $region19: #{tpu_custom_call.1} parent=1 // pred_check_branch
      %67 = sbr.rel (0) target = $region21
    $region20: #{tpu_custom_call.1} parent=1 // pred_region
      _
    $region21: #{tpu_custom_call.1} parent=1 // pred_fallthru
      _
    // Predicated region
    $region22: #{tpu_custom_call.1} parent=1 // pred_check
      _
    $region23: #{tpu_custom_call.1} parent=1 // pred_check_branch
      %69 = sbr.rel (0) target = $region25
    $region24: #{tpu_custom_call.1} parent=1 // pred_region
      %71 = dma.done [#allocation3], 256
    $region25: #{tpu_custom_call.1} parent=1 // pred_fallthru
      _
    // Predicated region
    $region26: #{tpu_custom_call.1} parent=1 // pred_check
      _
    $region27: #{tpu_custom_call.1} parent=1 // pred_check_branch
      %73 = sbr.rel (0) target = $region29
    $region28: #{tpu_custom_call.1} parent=1 // pred_region
      %75 = dma.done [#allocation6], 32
    $region29: #{tpu_custom_call.1} parent=1 // pred_fallthru
      _
    // Predicated region
    $region30: #{tpu_custom_call.1} parent=1 // pred_check
      _
    $region31: #{tpu_custom_call.1} parent=1 // pred_check_branch
      %77 = sbr.rel (0) target = $region33
    $region32: #{tpu_custom_call.1} parent=1 // pred_region
      %79 = dma.done [#allocation6], 32
    $region33: #{tpu_custom_call.1} parent=1 // pred_fallthru
      _
    // Predicated region
    $region34: #{tpu_custom_call.1} parent=1 // pred_check
      _
    $region35: #{tpu_custom_call.1} parent=1 // pred_check_branch
      %81 = sbr.rel (0) target = $region37
    $region36: #{tpu_custom_call.1} parent=1 // pred_region
      %83 = dma.done [#allocation9], 512
    $region37: #{tpu_custom_call.1} parent=1 // pred_fallthru
      _
    %v84 = vld [vmem:[#allocation2] sm:$0xff]
    %v85 = vld [vmem:[#allocation2 + $0x8] sm:$0xff]
    %vm86 = vcmask 261120
    %v87 = vsel %vm86, %v84, 0.0
    %88 = vadd.xlane.f32.xlu0 %v87
    %v89 = vpop.xlane.xlu0 %88
    %v90 = vsel %vm86, %v85, 0.0
    %91 = vadd.xlane.f32.xlu0 %v90
    %v92 = vpop.xlane.xlu0 %91
    %v93 = vrcp.pop 32.0
    %v94 = vmul.f32 32.0, %v93
    %v95 = vsub.f32 1.0, %v94
    %v96 = vmul.f32 %v93, %v95
    %v97 = vadd.f32 %v93, %v96
    %vm98 = vweird.f32 %v93
    %v99 = vsel %vm98, %v93, %v97
    %v100 = vmul.f32 %v89, %v99
    %v101 = vmul.f32 %v92, %v99
    %v102 = vsub.f32 %v84, %v100
    %v103 = vsub.f32 %v85, %v101
    %v104 = vmul.f32 %v102, %v102
    %v105 = vmul.f32 %v103, %v103
    %v106 = vsel %vm86, %v104, 0.0
    %107 = vadd.xlane.f32.xlu0 %v106
    %v108 = vpop.xlane.xlu0 %107
    %v109 = vsel %vm86, %v105, 0.0
    %110 = vadd.xlane.f32.xlu0 %v109
    %v111 = vpop.xlane.xlu0 %110
    %v112 = vmul.f32 %v108, %v99
    %v113 = vmul.f32 %v111, %v99
    %v114 = vadd.f32 %v112, 1e-06
    %v115 = vadd.f32 %v113, 1e-06
    %v116 = vrsqrt.pop %v114
    %v117 = vmul.f32 %v116, %v114
    %v118 = vmul.f32 %v117, %v116
    %v119 = vmul.f32 0.5, %v118
    %v120 = vsub.f32 1.5, %v119
    %v121 = vmul.f32 %v116, %v120
    %vm122 = vweird.f32 %v114
    %vm123 = vweird.f32 %v116
    %vm124 = vmor %vm122, %vm123
    %v125 = vsel %vm124, %v116, %v121
    %v126 = vrsqrt.pop %v115
    %v127 = vmul.f32 %v126, %v115
    %v128 = vmul.f32 %v127, %v126
    %v129 = vmul.f32 0.5, %v128
    %v130 = vsub.f32 1.5, %v129
    %v131 = vmul.f32 %v126, %v130
    %vm132 = vweird.f32 %v115
    %vm133 = vweird.f32 %v126
    %vm134 = vmor %vm132, %vm133
    %v135 = vsel %vm134, %v126, %v131
    %v136 = vmul.f32 %v102, %v125
    %v137 = vmul.f32 %v103, %v135
    %v138 = vld [vmem:[#allocation7] sm:$0x1]
    %v139 = vld [vmem:[#allocation7 + $0x1] sm:$0x1]
    %v142 = vperm.slane %v138, 0
    %v143 = vperm.slane %v139, 0
    %v146 = vmul.f32 %v136, %v142
    %v147 = vmul.f32 %v137, %v143
    %v148 = vld [vmem:[#allocation5] sm:$0x1]
    %v149 = vld [vmem:[#allocation5 + $0x1] sm:$0x1]
    %v152 = vperm.slane %v148, 0
    %v153 = vperm.slane %v149, 0
    %v156 = vadd.f32 %v146, %v152
    %v157 = vadd.f32 %v147, %v153
    %v158 = vld [vmem:[#allocation8] sm:$0xff]
    %v159 = vld [vmem:[#allocation8 + $0x8] sm:$0xff]
    %v160 = vld [vmem:[#allocation8 + $0x10] sm:$0xff]
    %v161 = vld [vmem:[#allocation8 + $0x18] sm:$0xff]
    %v162 = vld [vmem:[%s4] sm:$0x1]
    %v164 = vperm.slane %v162, 0
    %v167 = vsel %vm86, %v156, 0
    %v170 = vsel %vm86, %v157, 0
    %172 = vmatpush.msra.mxu0 0.0
    %173 = vmatpush.msra.mxu0 0.0
    %174 = vmatpush.msra.mxu0 0.0
    %175 = vmatpush.msra.mxu0 0.0
    %176 = vmatpush.msra.mxu0 0.0
    %177 = vmatpush.msra.mxu0 0.0
    %178 = vmatpush.msra.mxu0 0.0
    %179 = vmatpush.msra.mxu0 0.0
    %180 = vmatpush.msra.mxu0 0.0
    %181 = vmatpush.msra.mxu0 0.0
    %182 = vmatpush.msra.mxu0 0.0
    %183 = vmatpush.msra.mxu0 0.0
    %184 = vmatpush.msra.mxu0 %v161
    %185 = vmatpush.msra.mxu0 %v160
    %186 = vmatpush.msra.mxu0 %v159
    %187 = vmatpush.msra.mxu0 %v158
    %188 = vmatmul.f32.gmra.mxu0 %v167
    %v189 = vpop.f32.mrf.mxu0
    %v190 = vadd.f32 %v164, %v189
    %191 = vmatmul.f32.gmra.mxu0 %v170
    %v192 = vpop.f32.mrf.mxu0
    %v193 = vadd.f32 %v164, %v192
    %194 = vdwg.mxu0
    %195 = vst [vmem:[#allocation10] sm:$0xff] %v190
    %196 = vst [vmem:[#allocation10 + $0x8] sm:$0xff] %v193
    // Predicated region
    $region38: #{tpu_custom_call.1} parent=1 // pred_check
      _
    $region39: #{tpu_custom_call.1} parent=1 // pred_check_branch
      %198 = sbr.rel (0) target = $region41
    $region40: #{tpu_custom_call.1} parent=1 // pred_region
      %200 = vsyncadd [#allocation4], 0
      %s201 = sshll.u32 [#allocation10], 4
      %s202 = int_to_ptr.vmem [resolvable:$true] %s201
      %s203 = sshll.u32 %s5, 4
      %s204 = int_to_ptr.hbm [resolvable:$true] %s203
      %209 = dma.vmem_to_hbm [thread:$0]  %s202, 256, %s204, [#allocation4], 128, 128, 8
    $region41: #{tpu_custom_call.1} parent=1 // pred_fallthru
      _
    // Predicated region
    $region42: #{tpu_custom_call.1} parent=1 // pred_check
      _
    $region43: #{tpu_custom_call.1} parent=1 // pred_check_branch
      %211 = sbr.rel (0) target = $region45
    $region44: #{tpu_custom_call.1} parent=1 // pred_region
      %213 = dma.done [#allocation4], 256
    $region45: #{tpu_custom_call.1} parent=1 // pred_fallthru
      _
    %214 = vsyncpa [#allocation3], 1
    %215 = vsyncpa [#allocation6], 1
    %216 = vsyncpa [#allocation9], 1
    %217 = vsyncpa [#allocation4], 1

</llo_original>
